<compile_context>
chip_gen: v5e
topology: v5e:2x2
jax: 0.10.0
libtpu: 0.0.40
codegen_flags: <defaults>
</compile_context>

<pallas_src>
import functools

import jax
import jax.numpy as jnp
from jax.experimental import pallas as pl
from jax.experimental.pallas import tpu as pltpu

LANE = 128
MAX_TILE_ROWS = 8192     # bound per-op vreg counts for pathological tall matrices
MAX_TILE_LANES = 2048    # tile_i <= 256K columns


def _cdiv(a, b):
    return -(-a // b)


def _round_up(a, b):
    return _cdiv(a, b) * b


def _num_tensorcores() -> int:
    """TensorCores addressable from one Pallas program (megacore chips -> 2)."""
    try:
        kind = jax.devices()[0].device_kind.lower()
    except Exception:
        return 1
    if ("v4" in kind) or ("v5p" in kind) or ("7" in kind):   # v4 / v5p / v7x
        return 2
    return 1                                                  # v2/v3/v5e/v6e per-device


def _vmem_limit_bytes() -> int:
    """~3/4 of physical VMEM (96 MiB on v5e/v6e, 48 MiB on v7x)."""
    cap = 0
    try:
        info = pltpu.get_tpu_info()
        for name in ("vmem_capacity_bytes", "vmem_bytes", "vmem_size_bytes"):
            v = getattr(info, name, None)
            if v:
                cap = int(v)
                break
    except Exception:
        cap = 0
    if cap <= 0:
        cap = 64 * 1024 * 1024   # conservative fallback: v7x per-core VMEM
    return max(32 * 1024 * 1024, (cap * 3) // 4)


def _sparsity_loss_kernel(w_ref, o_ref, colsq_ref, norm_ref, *,
                          out_rows, in_cols, tile_o, tile_i,
                          tiles_per_core, num_col_tiles,
                          mask_rows, mask_cols, has_pad_tile):
    c = pl.program_id(0)          # core shard (leading "parallel" axis)
    i = pl.program_id(1)          # column-tile index within this core's shard
    k = pl.program_id(2)          # row-block index (reduction over out_features)
    ni = pl.num_programs(1)
    nk = pl.num_programs(2)

    g = c * tiles_per_core + i    # global column-tile index (may exceed num_col_tiles-1)

    # Start of this core's sweep: zero the running sum of per-column norms.
    @pl.when(jnp.logical_and(i == 0, k == 0))
    def _():
        norm_ref[...] = jnp.zeros_like(norm_ref)

    # Start of each column tile: zero the per-column sum-of-squares accumulator.
    @pl.when(k == 0)
    def _():
        colsq_ref[...] = jnp.zeros_like(colsq_ref)

    def accumulate():
        w = w_ref[...].astype(jnp.float32)                    # (tile_o, tile_i)
        if mask_rows:   # static: only emitted when out_features is ragged vs tile_o
            rows = jax.lax.broadcasted_iota(jnp.int32, (tile_o, 1), 0) + k * tile_o
            w = jnp.where(rows < out_rows, w, 0.0)
        if mask_cols:   # static: only emitted when in_features is ragged vs tile_i
            cols = jax.lax.broadcasted_iota(jnp.int32, (1, tile_i), 1) + g * tile_i
            w = jnp.where(cols < in_cols, w, 0.0)
        colsq_ref[...] += jnp.sum(w * w, axis=0, keepdims=True)   # lane-dense (1,tile_i)

    if has_pad_tile:
        # Last core may revisit (a clamped copy of) the final valid tile: skip compute
        # so its contribution is not double counted.
        @pl.when(g < num_col_tiles)
        def _():
            accumulate()
    else:
        accumulate()

    # Row reduction for this column tile complete -> fold in its column norms.
    @pl.when(k == nk - 1)
    def _():
        norm_ref[...] += jnp.sqrt(colsq_ref[...])

    # Single cross-lane reduce + store, once per core, at the very end of its sweep.
    @pl.when(jnp.logical_and(i == ni - 1, k == nk - 1))
    def _():
        total = jnp.sum(norm_ref[...])
        r = jax.lax.broadcasted_iota(jnp.int32, o_ref.shape, 0)
        q = jax.lax.broadcasted_iota(jnp.int32, o_ref.shape, 1)
        o_ref[...] = jnp.where((r == 0) & (q == 0), total, 0.0)


def sparsity_loss(w: jax.Array, *, num_parallel: int | None = None,
                  vmem_budget_bytes: int | None = None) -> jax.Array:
    """sum_j ||w[:, j]||_2  ==  torch.norm(w, p=2, dim=0).sum(), as a Pallas TPU kernel.

    `w` is the input-layer weight in nn.Linear convention (out_features, in_features),
    i.e. what model.get_input_layer_weights() returns.  The kernel is HBM-bandwidth
    bound and reads `w` in its storage dtype (pass bf16 weights to halve HBM traffic;
    squares/sums always accumulate in f32 inside VMEM).
    """
    if w.ndim != 2:
        raise ValueError(f"expected a 2-D weight matrix, got shape {w.shape}")
    O, I = w.shape
    dtype_bytes = jnp.dtype(w.dtype).itemsize
    sub = 8 * max(1, 4 // dtype_bytes)        # sublane packing: 8 f32 / 16 bf16 / 32 int8

    vmem_limit = _vmem_limit_bytes()
    if vmem_budget_bytes is None:
        usable = max(vmem_limit - 16 * 1024 * 1024, 8 * 1024 * 1024)
    else:
        usable = max(int(vmem_budget_bytes), 4 * 1024)

    num_par = num_parallel if num_parallel is not None else _num_tensorcores()
    num_par = max(1, int(num_par))

    # --- row (out_features, reduced) tiling -------------------------------------------
    if O <= sub:
        tile_o = O                              # full dim: exempt from the (8, *) rule
    else:
        O_pad = _round_up(O, sub)
        cap_rows = (usable // (2 * LANE * dtype_bytes)) // sub * sub
        cap_rows = max(sub, min(cap_rows, MAX_TILE_ROWS))
        tile_o = min(O_pad, cap_rows)
    num_row_tiles = _cdiv(O, tile_o)

    # --- column (in_features, kept) tiling --------------------------------------------
    if I <= LANE:
        tile_i = I                              # full dim: exempt from the (*, 128) rule
        num_col_tiles = 1
        num_par = 1
    else:
        L = _cdiv(I, LANE)                      # number of 128-lane column groups
        if num_par > L:
            num_par = 1
        # Bytes per lane group: double-buffered input block + two (1, .) f32 scratches
        # (which physically occupy 8 sublanes each).
        per_group = 2 * tile_o * LANE * dtype_bytes + 2 * 8 * LANE * 4
        tile_lanes = max(1, min(usable // per_group, MAX_TILE_LANES, _cdiv(L, num_par)))
        tile_i = tile_lanes * LANE
        num_col_tiles = _cdiv(L, tile_lanes)

    tiles_per_core = _cdiv(num_col_tiles, num_par)
    has_pad_tile = tiles_per_core * num_par != num_col_tiles
    mask_rows = (O % tile_o) != 0
    mask_cols = (I % tile_i) != 0

    kernel = functools.partial(
        _sparsity_loss_kernel,
        out_rows=O, in_cols=I, tile_o=tile_o, tile_i=tile_i,
        tiles_per_core=tiles_per_core, num_col_tiles=num_col_tiles,
        mask_rows=mask_rows, mask_cols=mask_cols, has_pad_tile=has_pad_tile)

    def in_map(c, i, k):
        g = c * tiles_per_core + i
        if has_pad_tile:
            g = jnp.minimum(g, num_col_tiles - 1)   # never issue an entirely-OOB block
        return (k, g)

    grid = (num_par, tiles_per_core, num_row_tiles)
    bytes_read = (num_par * tiles_per_core * num_row_tiles
                  * tile_o * tile_i * dtype_bytes)

    partials = pl.pallas_call(
        kernel,
        out_shape=jax.ShapeDtypeStruct((num_par * 8, 128), jnp.float32),
        grid_spec=pltpu.PrefetchScalarGridSpec(
            num_scalar_prefetch=0,
            grid=grid,
            in_specs=[pl.BlockSpec((tile_o, tile_i), in_map)],
            out_specs=pl.BlockSpec((8, 128), lambda c, i, k: (c, 0)),
            scratch_shapes=[pltpu.VMEM((1, tile_i), jnp.float32),   # col sum-of-squares
                            pltpu.VMEM((1, tile_i), jnp.float32)],  # running norm sum
        ),
        compiler_params=pltpu.CompilerParams(
            dimension_semantics=("parallel", "arbitrary", "arbitrary"),
            vmem_limit_bytes=vmem_limit,
        ),
        cost_estimate=pl.CostEstimate(
            flops=2 * O * I,
            transcendentals=I,
            bytes_accessed=bytes_read + num_par * 8 * 128 * 4,
        ),
    )(w)
    # Only element [c*8, 0] of each core's block is non-zero; sum collapses the partials.
    return jnp.sum(partials)


if __name__ == "__main__":
    key = jax.random.PRNGKey(0)
    k1, k2, k3, k4 = jax.random.split(key, 4)

    def ref_loss(x):
        xf = x.astype(jnp.float32)
        return jnp.sum(jnp.sqrt(jnp.sum(xf * xf, axis=0)))

    # 1) Typical aligned input-layer weight, nn.Linear convention
    #    (out_features=hidden=32, in_features=256) == model.get_input_layer_weights().
    w = jax.random.normal(k1, (32, 256), dtype=jnp.float32) * 0.1
    loss = jax.block_until_ready(sparsity_loss(w))
    assert jnp.allclose(loss, ref_loss(w), rtol=1e-5, atol=1e-5), (loss, ref_loss(w))

    # 2) Unaligned shape -> exercises in-kernel row/column edge masking (no jnp.pad copy).
    w2 = jax.random.normal(k2, (30, 200), dtype=jnp.float32) * 0.1
    loss2 = jax.block_until_ready(sparsity_loss(w2))
    assert jnp.allclose(loss2, ref_loss(w2), rtol=1e-5, atol=1e-5), (loss2, ref_loss(w2))

    # 3) bf16 storage (recommended: halves HBM traffic); kernel upcasts to f32 in VMEM.
    w3 = (jax.random.normal(k3, (30, 200), dtype=jnp.float32) * 0.1).astype(jnp.bfloat16)
    loss3 = jax.block_until_ready(sparsity_loss(w3))
    assert jnp.allclose(loss3, ref_loss(w3), rtol=2e-2, atol=2e-2), (loss3, ref_loss(w3))

    # 4) Tiny VMEM budget + forced 2-way core split -> exercises multi-tile grid,
    #    multi-step row reduction, the clamped index_map / pad-tile skip, and edge masks.
    w4 = jax.random.normal(k4, (100, 300), dtype=jnp.float32) * 0.1
    loss4 = jax.block_until_ready(
        sparsity_loss(w4, num_parallel=2, vmem_budget_bytes=64 * 1024))
    assert jnp.allclose(loss4, ref_loss(w4), rtol=1e-5, atol=1e-5), (loss4, ref_loss(w4))

    print("KERNEL_OK")
</pallas_src>

<mosaic_0001>
module attributes {stable_mosaic.version = 11 : i64} {
  func.func @_sparsity_loss_kernel(%arg0: i32, %arg1: i32, %arg2: i32, %arg3: memref<32x256xf32, #tpu.memory_space<vmem>>, %arg4: memref<8x128xf32, #tpu.memory_space<vmem>>, %arg5: memref<1x256xf32, #tpu.memory_space<vmem>>, %arg6: memref<1x256xf32, #tpu.memory_space<vmem>>) attributes {dimension_semantics = [#tpu.dimension_semantics<parallel>, #tpu.dimension_semantics<arbitrary>, #tpu.dimension_semantics<arbitrary>], iteration_bounds = array<i64: 1, 1, 1>, scalar_prefetch = 0 : i64, scratch_operands = 2 : i64, tpu.core_type = #tpu.core_type<tc>, window_params = [{transform_indices = @transform_0, window_bounds = array<i64: 32, 256>}, {transform_indices = @transform_1, window_bounds = array<i64: 8, 128>}]} {
    %c0_i32 = arith.constant 0 : i32
    %0 = arith.cmpi eq, %arg1, %c0_i32 : i32
    %c0_i32_0 = arith.constant 0 : i32
    %1 = arith.cmpi eq, %arg2, %c0_i32_0 : i32
    %2 = arith.andi %0, %1 : i1
    %3 = arith.extui %2 : i1 to i32
    %c0_i32_1 = arith.constant 0 : i32
    %4 = arith.cmpi ne, %3, %c0_i32_1 : i32
    scf.if %4 {
      %cst_14 = arith.constant 0.000000e+00 : f32
      %23 = vector.broadcast %cst_14 : f32 to vector<1x256xf32>
      %c0_15 = arith.constant 0 : index
      %c0_16 = arith.constant 0 : index
      %24 = vector.load %arg6[%c0_15, %c0_16] : memref<1x256xf32, #tpu.memory_space<vmem>>, vector<1x256xf32>
      tpu.vector_store %arg6[%c0_15, %c0_16], %23 {strides = array<i32>} : memref<1x256xf32, #tpu.memory_space<vmem>>, vector<1x256xf32>,
    } else {
    }
    %c0_i32_2 = arith.constant 0 : i32
    %5 = arith.cmpi eq, %arg2, %c0_i32_2 : i32
    %6 = arith.extui %5 : i1 to i32
    %c0_i32_3 = arith.constant 0 : i32
    %7 = arith.cmpi ne, %6, %c0_i32_3 : i32
    scf.if %7 {
      %cst_14 = arith.constant 0.000000e+00 : f32
      %23 = vector.broadcast %cst_14 : f32 to vector<1x256xf32>
      %c0_15 = arith.constant 0 : index
      %c0_16 = arith.constant 0 : index
      %24 = vector.load %arg5[%c0_15, %c0_16] : memref<1x256xf32, #tpu.memory_space<vmem>>, vector<1x256xf32>
      tpu.vector_store %arg5[%c0_15, %c0_16], %23 {strides = array<i32>} : memref<1x256xf32, #tpu.memory_space<vmem>>, vector<1x256xf32>,
    } else {
    }
    %c0 = arith.constant 0 : index
    %c0_4 = arith.constant 0 : index
    %8 = vector.load %arg3[%c0, %c0_4] : memref<32x256xf32, #tpu.memory_space<vmem>>, vector<32x256xf32>
    %c0_5 = arith.constant 0 : index
    %c0_6 = arith.constant 0 : index
    %9 = vector.load %arg5[%c0_5, %c0_6] : memref<1x256xf32, #tpu.memory_space<vmem>>, vector<1x256xf32>
    %10 = arith.mulf %8, %8 : vector<32x256xf32>
    %cst = arith.constant dense<0.000000e+00> : vector<256xf32>
    %11 = vector.multi_reduction <add>, %10, %cst [0] : vector<32x256xf32> to vector<256xf32>
    %12 = vector.shape_cast %11 : vector<256xf32> to vector<1x256xf32>
    %13 = arith.addf %9, %12 : vector<1x256xf32>
    %c0_7 = arith.constant 0 : index
    %c0_8 = arith.constant 0 : index
    %14 = vector.load %arg5[%c0_7, %c0_8] : memref<1x256xf32, #tpu.memory_space<vmem>>, vector<1x256xf32>
    tpu.vector_store %arg5[%c0_7, %c0_8], %13 {strides = array<i32>} : memref<1x256xf32, #tpu.memory_space<vmem>>, vector<1x256xf32>,
    %c0_i32_9 = arith.constant 0 : i32
    %15 = arith.cmpi eq, %arg2, %c0_i32_9 : i32
    %16 = arith.extui %15 : i1 to i32
    %c0_i32_10 = arith.constant 0 : i32
    %17 = arith.cmpi ne, %16, %c0_i32_10 : i32
    scf.if %17 {
      %c0_14 = arith.constant 0 : index
      %c0_15 = arith.constant 0 : index
      %23 = vector.load %arg6[%c0_14, %c0_15] : memref<1x256xf32, #tpu.memory_space<vmem>>, vector<1x256xf32>
      %c0_16 = arith.constant 0 : index
      %c0_17 = arith.constant 0 : index
      %24 = vector.load %arg5[%c0_16, %c0_17] : memref<1x256xf32, #tpu.memory_space<vmem>>, vector<1x256xf32>
      %25 = math.sqrt %24 : vector<1x256xf32>
      %26 = arith.addf %23, %25 : vector<1x256xf32>
      %c0_18 = arith.constant 0 : index
      %c0_19 = arith.constant 0 : index
      %27 = vector.load %arg6[%c0_18, %c0_19] : memref<1x256xf32, #tpu.memory_space<vmem>>, vector<1x256xf32>
      tpu.vector_store %arg6[%c0_18, %c0_19], %26 {strides = array<i32>} : memref<1x256xf32, #tpu.memory_space<vmem>>, vector<1x256xf32>,
    } else {
    }
    %c0_i32_11 = arith.constant 0 : i32
    %18 = arith.cmpi eq, %arg1, %c0_i32_11 : i32
    %c0_i32_12 = arith.constant 0 : i32
    %19 = arith.cmpi eq, %arg2, %c0_i32_12 : i32
    %20 = arith.andi %18, %19 : i1
    %21 = arith.extui %20 : i1 to i32
    %c0_i32_13 = arith.constant 0 : i32
    %22 = arith.cmpi ne, %21, %c0_i32_13 : i32
    scf.if %22 {
      %c0_14 = arith.constant 0 : index
      %c0_15 = arith.constant 0 : index
      %23 = vector.load %arg6[%c0_14, %c0_15] : memref<1x256xf32, #tpu.memory_space<vmem>>, vector<1x256xf32>
      %24 = vector.shape_cast %23 : vector<1x256xf32> to vector<1x1x256xf32>
      %cst_16 = arith.constant dense<0.000000e+00> : vector<1xf32>
      %25 = vector.multi_reduction <add>, %24, %cst_16 [1, 2] : vector<1x1x256xf32> to vector<1xf32>
      %26 = vector.shape_cast %25 : vector<1xf32> to vector<1x1x1xf32>
      %27 = vector.extract %26[0, 0, 0] : f32 from vector<1x1x1xf32>
      %28 = tpu.iota {dimensions = array<i32: 0>} : vector<8x128xi32>
      %29 = tpu.iota {dimensions = array<i32: 1>} : vector<8x128xi32>
      %c0_i32_17 = arith.constant 0 : i32
      %30 = vector.broadcast %c0_i32_17 : i32 to vector<8x128xi32>
      %31 = arith.cmpi eq, %28, %30 : vector<8x128xi32>
      %c0_i32_18 = arith.constant 0 : i32
      %32 = vector.broadcast %c0_i32_18 : i32 to vector<8x128xi32>
      %33 = arith.cmpi eq, %29, %32 : vector<8x128xi32>
      %34 = arith.andi %31, %33 : vector<8x128xi1>
      %cst_19 = arith.constant 0.000000e+00 : f32
      %35 = vector.broadcast %27 : f32 to vector<8x128xf32>
      %36 = vector.broadcast %cst_19 : f32 to vector<8x128xf32>
      %37 = arith.select %34, %35, %36 : vector<8x128xi1>, vector<8x128xf32>
      %c0_20 = arith.constant 0 : index
      %c0_21 = arith.constant 0 : index
      %38 = vector.load %arg4[%c0_20, %c0_21] : memref<8x128xf32, #tpu.memory_space<vmem>>, vector<8x128xf32>
      tpu.vector_store %arg4[%c0_20, %c0_21], %37 {strides = array<i32>} : memref<8x128xf32, #tpu.memory_space<vmem>>, vector<8x128xf32>,
    } else {
    }
    return
  }
  func.func @transform_0(%arg0: i32, %arg1: i32, %arg2: i32) -> (i32, i32) {
    %c1_i32 = arith.constant 1 : i32
    %0 = arith.muli %arg0, %c1_i32 : i32
    %1 = arith.addi %0, %arg1 : i32
    %c0_i32 = arith.constant 0 : i32
    return %arg2, %1 : i32, i32
  }
  func.func @transform_1(%arg0: i32, %arg1: i32, %arg2: i32) -> (i32, i32) {
    %c0_i32 = arith.constant 0 : i32
    %c0_i32_0 = arith.constant 0 : i32
    return %arg0, %c0_i32 : i32, i32
  }
}

</mosaic_0001>

<llo_original>
// kernel: tpu_custom_call.1
$region0: #{tpu_custom_call.1}
  #allocation0 [shape = 'u32[]', space=smem, size = 0x4, offset = 0x4, fixed_abs, tag = 'smem constant byte address 0x4 - core index']
  #allocation1 [shape = 'u32[72,128]{1,0:T(1,128)}', space=vmem, size = 0x9000, scoped, tag = 'internal scratch']
  #allocation2 [shape = 'f32[1,256]{1,0:T(1,128)}', space=vmem, size = 0x400, scoped, tag = 'scratch operand']
  #allocation3 [shape = 'f32[1,256]{1,0:T(1,128)}', space=vmem, size = 0x400, scoped, tag = 'scratch operand']
  %s0 = inlined_call_operand.hbm [shape: f32[32,256], index: 0, kind: input, shape index: {}]
  %s1 = inlined_call_operand.hbm [shape: f32[8,128], index: 1, kind: output, shape index: {}]
  %s2 = sld [smem:[#allocation0]]
  $region34: #{tpu_custom_call.1} parent=0
    _
  %s4 = ssub.s32 1, %s2
  %s5 = scalar_select 0, %s4, %s2
  $region1: #{tpu_custom_call.1} parent=0
    #allocation4 [shape = 'u8[32768]{0}', space=vmem, size = 0x8000, scoped, tag = 'input window, operand 0, single buffered']
    #allocation5 [shape = 's32[1]{0}', space=sflag, size = 0x4, scoped, tag = 'scoped memory for tpu_custom_call.1']
    #allocation6 [shape = 's32[1]{0}', space=sflag, size = 0x4, scoped, tag = 'scoped memory for tpu_custom_call.1']
    #allocation7 [shape = 'u8[4096]{0}', space=vmem, size = 0x1000, scoped, tag = 'output window, operand 0, single buffered']
    %6 = vsyncpa [#allocation5], 0
    %7 = vsyncpa [#allocation6], 0
    // Predicated region
    $region2: #{tpu_custom_call.1} parent=1 // pred_check
      _
    $region3: #{tpu_custom_call.1} parent=1 // pred_check_branch
      %9 = sbr.rel (0) target = $region5
    $region4: #{tpu_custom_call.1} parent=1 // pred_region
      %s10 = sadd.s32 0, 0
      %s11 = smul.u32 2, %s10
      %13 = vsyncadd [#allocation5], 0
      %s14 = smul.addr %s11, 8
      %s15 = scalar_lea.hbm %s0, %s14
      %s16 = sshll.u32 %s15, 4
      %s17 = int_to_ptr.hbm [resolvable:$true] %s16
      %s18 = sshll.u32 [#allocation4], 4
      %s19 = int_to_ptr.vmem [resolvable:$true] %s18
      %24 = dma.hbm_to_vmem [thread:$0]  %s17, 1024, %s19, [#allocation5], 256, 256, 16
    $region5: #{tpu_custom_call.1} parent=1 // pred_fallthru
      _
    // Predicated region
    $region6: #{tpu_custom_call.1} parent=1 // pred_check
      _
    $region7: #{tpu_custom_call.1} parent=1 // pred_check_branch
      %26 = sbr.rel (0) target = $region9
    $region8: #{tpu_custom_call.1} parent=1 // pred_region
      %28 = dma.done [#allocation5], 1024
    $region9: #{tpu_custom_call.1} parent=1 // pred_fallthru
      _
    %s29 = sadd.s32 0, 0
    %s30 = smul.u32 2, %s29
    %p31 = scmp.eq.s32.totalorder 0, 0
    %p32 = scmp.eq.s32.totalorder 0, 0
    %p33 = pnand %p31, %p32
    %p34 = pneg %p33
    // Predicated region
    $region10: #{tpu_custom_call.1} parent=1 // pred_check
      _
    $region11: #{tpu_custom_call.1} parent=1 // pred_check_branch
      %36 = sbr.rel (%p33) target = $region13
    $region12: #{tpu_custom_call.1} parent=1 // pred_region
      %v37 = vlaneseq
      %vm38 = vcmp.ge.s32.totalorder %v37, 0
      %vm39 = vcmp.lt.s32.totalorder %v37, 256
      %vm40 = vmand %vm38, %vm39
      %41 = vst.msk [vmem:[#allocation3] sm:$0x3] %vm40, 0.0
    $region13: #{tpu_custom_call.1} parent=1 // pred_fallthru
      _
    // Predicated region
    $region14: #{tpu_custom_call.1} parent=1 // pred_check
      %p42 = pneg %p32
    $region15: #{tpu_custom_call.1} parent=1 // pred_check_branch
      %44 = sbr.rel (%p42) target = $region17
    $region16: #{tpu_custom_call.1} parent=1 // pred_region
      %v45 = vlaneseq
      %vm46 = vcmp.ge.s32.totalorder %v45, 0
      %vm47 = vcmp.lt.s32.totalorder %v45, 256
      %vm48 = vmand %vm46, %vm47
      %49 = vst.msk [vmem:[#allocation2] sm:$0x3] %vm48, 0.0
    $region17: #{tpu_custom_call.1} parent=1 // pred_fallthru
      _
    %v50 = vld [vmem:[#allocation4] sm:$0xff]
    %v51 = vld [vmem:[#allocation4 + $0x8] sm:$0xff]
    %v52 = vld [vmem:[#allocation4 + $0x10] sm:$0xff]
    %v53 = vld [vmem:[#allocation4 + $0x18] sm:$0xff]
    %v54 = vld [vmem:[#allocation4 + $0x20] sm:$0xff]
    %v55 = vld [vmem:[#allocation4 + $0x28] sm:$0xff]
    %v56 = vld [vmem:[#allocation4 + $0x30] sm:$0xff]
    %v57 = vld [vmem:[#allocation4 + $0x38] sm:$0xff]
    %v58 = vld [vmem:[#allocation2] sm:$0x3]
    %v59 = vmul.f32 %v50, %v50
    %v60 = vmul.f32 %v51, %v51
    %v61 = vmul.f32 %v52, %v52
    %v62 = vmul.f32 %v53, %v53
    %v63 = vmul.f32 %v54, %v54
    %v64 = vmul.f32 %v55, %v55
    %v65 = vmul.f32 %v56, %v56
    %v66 = vmul.f32 %v57, %v57
    %v67 = vadd.f32 %v59, %v61
    %v68 = vadd.f32 %v67, %v63
    %v69 = vadd.f32 %v68, %v65
    %v70 = vrot.slane %v69, 4
    %v71 = vadd.f32 %v69, %v70
    %v72 = vrot.slane %v71, 2
    %v73 = vadd.f32 %v71, %v72
    %v74 = vrot.slane %v73, 1
    %v75 = vadd.f32 %v73, %v74
    %v76 = vadd.f32 %v60, %v62
    %v77 = vadd.f32 %v76, %v64
    %v78 = vadd.f32 %v77, %v66
    %v79 = vrot.slane %v78, 4
    %v80 = vadd.f32 %v78, %v79
    %v81 = vrot.slane %v80, 2
    %v82 = vadd.f32 %v80, %v81
    %v83 = vrot.slane %v82, 1
    %v84 = vadd.f32 %v82, %v83
    %v87 = vrot.slane %v84, 7
    %vm88 = vcmask 1040384
    %v89 = vsel %vm88, %v75, %v87
    %v91 = vadd.f32 %v58, %v89
    %v92 = vlaneseq
    %vm93 = vcmp.ge.s32.totalorder %v92, 0
    %vm94 = vcmp.lt.s32.totalorder %v92, 256
    %vm95 = vmand %vm93, %vm94
    %96 = vst.msk [vmem:[#allocation2] sm:$0x3] %vm95, %v91
    // Predicated region
    $region18: #{tpu_custom_call.1} parent=1 // pred_check
      %p97 = pneg %p32
    $region19: #{tpu_custom_call.1} parent=1 // pred_check_branch
      %99 = sbr.rel (%p97) target = $region21
    $region20: #{tpu_custom_call.1} parent=1 // pred_region
      %v100 = vld [vmem:[#allocation3] sm:$0x3]
      %v101 = vld [vmem:[#allocation2] sm:$0x3]
      %v102 = vrsqrt.pop %v101
      %v103 = vmul.f32 %v102, %v101
      %v104 = vmul.f32 %v103, %v102
      %v105 = vmul.f32 0.5, %v104
      %v106 = vsub.f32 1.5, %v105
      %v107 = vmul.f32 %v102, %v106
      %v108 = vmul.f32 %v101, %v107
      %vm109 = vcmp.eq.f32.partialorder %v101, inf
      %v110 = vsel %vm109, %v101, %v108
      %vm111 = vcmp.eq.f32.partialorder %v101, 0.0
      %v112 = vand.u32 %v101, 2147483648
      %v113 = vsel %vm111, %v112, %v110
      %v114 = vadd.f32 %v100, %v113
      %115 = vst.msk [vmem:[#allocation3] sm:$0x3] %vm95, %v114
    $region21: #{tpu_custom_call.1} parent=1 // pred_fallthru
      _
    // Predicated region
    $region22: #{tpu_custom_call.1} parent=1 // pred_check
      _
    $region23: #{tpu_custom_call.1} parent=1 // pred_check_branch
      %117 = sbr.rel (%p33) target = $region25
    $region24: #{tpu_custom_call.1} parent=1 // pred_region
      %v118 = vld [vmem:[#allocation3] sm:$0x3]
      %v120 = vperm.slane %v118, 0
      %v121 = vperm.slane %v118, 1
      %v124 = vsel %vm88, %v120, 0.0
      %v125 = vsel %vm88, %v121, 0.0
      %v126 = vadd.f32 %v124, %v125
      %127 = vadd.xlane.f32.xlu0 %v126
      %v128 = vpop.xlane.xlu0 %127
      %v129 = vrot.slane %v128, 4
      %v130 = vadd.f32 %v128, %v129
      %v131 = vrot.slane %v130, 2
      %v132 = vadd.f32 %v130, %v131
      %v133 = vrot.slane %v132, 1
      %v134 = vadd.f32 %v132, %v133
      %s135 = vtos %v134
      %v136 = vlaneseq
      %v137 = vshrl.u32 %v136, 7
      %v138 = vlaneseq
      %v139 = vand.u32 %v138, 127
      %vm140 = vcmp.eq.s32.totalorder %v137, 0
      %vm141 = vcmp.eq.s32.totalorder %v139, 0
      %vm142 = vmand %vm140, %vm141
      %v143 = vstv %s135
      %v144 = vsel %vm142, %v143, 0.0
      %145 = vst [vmem:[#allocation7] sm:$0xff] %v144
    $region25: #{tpu_custom_call.1} parent=1 // pred_fallthru
      _
    // Predicated region
    $region26: #{tpu_custom_call.1} parent=1 // pred_check
      _
    $region27: #{tpu_custom_call.1} parent=1 // pred_check_branch
      %147 = sbr.rel (0) target = $region29
    $region28: #{tpu_custom_call.1} parent=1 // pred_region
      %149 = vsyncadd [#allocation6], 0
      %s151 = sshll.u32 [#allocation7], 4
      %s152 = int_to_ptr.vmem [resolvable:$true] %s151
      %s153 = sshll.u32 %s1, 4
      %s154 = int_to_ptr.hbm [resolvable:$true] %s153
      %156 = dma.vmem_to_hbm [thread:$0]  %s152, 128, %s154, [#allocation6]
    $region29: #{tpu_custom_call.1} parent=1 // pred_fallthru
      _
    // Predicated region
    $region30: #{tpu_custom_call.1} parent=1 // pred_check
      _
    $region31: #{tpu_custom_call.1} parent=1 // pred_check_branch
      %158 = sbr.rel (0) target = $region33
    $region32: #{tpu_custom_call.1} parent=1 // pred_region
      %160 = dma.done [#allocation6], 128
    $region33: #{tpu_custom_call.1} parent=1 // pred_fallthru
      _
    %161 = vsyncpa [#allocation5], 1
    %162 = vsyncpa [#allocation6], 1

</llo_original>
